<compile_context>
chip_gen: v7x
topology: tpu7x:2x2x1
jax: 0.10.0
libtpu: 0.0.40
codegen_flags: <defaults>
</compile_context>

<pallas_src>
import functools
import math

import jax
import jax.numpy as jnp
from jax.experimental import pallas as pl
from jax.experimental.pallas import tpu as pltpu


# ----------------------------------------------------------------------------
# VMEM limit (generation-aware)
# ----------------------------------------------------------------------------
def _vmem_limit_bytes():
    cap = None
    try:
        info = pltpu.get_tpu_info()
        cap = getattr(info, "vmem_capacity_bytes", None)
    except Exception:
        cap = None
    if cap is None:
        return 64 * 1024 * 1024
    if cap <= 64 * 1024 * 1024:          # v7x: 64 MiB physical, leave headroom
        return 48 * 1024 * 1024
    return 100 * 1024 * 1024             # v5e/v6e: 128 MiB physical


_VMEM_LIMIT = _vmem_limit_bytes()


# ----------------------------------------------------------------------------
# Tiling helpers
# ----------------------------------------------------------------------------
def _round_up(x, m):
    return ((x + m - 1) // m) * m


def _choose_rows_tile(m, target=512):
    """Return (tm, padded_M): tm divides padded_M, tm is 16-aligned (8 min)."""
    if m <= target:
        p = _round_up(m, 16)
        return p, p
    for align in (16, 8):
        start = target - (target % align)
        for t in range(start, align - 1, -align):
            if m % t == 0:
                return t, m
    # No aligned divisor: pad rows up to a multiple of the target tile.
    return target, _round_up(m, target)


def _pick_lane_tile(n, target=768):
    """Largest 128-aligned divisor of n that is <= target, else full n."""
    if n <= target:
        return n
    start = target - (target % 128)
    for t in range(start, 127, -128):
        if n % t == 0:
            return t
    return n


def _pad_rows(x, padded_m):
    m = x.shape[0]
    if padded_m == m:
        return x
    return jnp.pad(x, ((0, padded_m - m), (0, 0)))


# ----------------------------------------------------------------------------
# Dense:  o = act(x @ w + b)      (single K pass, weight-resident inner loop)
# ----------------------------------------------------------------------------
def _dense_kernel(x_ref, w_ref, b_ref, o_ref, *, activation):
    y = jnp.dot(x_ref[...], w_ref[...], preferred_element_type=jnp.float32)
    y = y + b_ref[...]
    if activation == "gelu":
        # TODO(synk): tanh-approx GELU (HF 'gelu' is erf-based).
        c = 0.7978845608028654  # sqrt(2/pi)
        y = 0.5 * y * (1.0 + jnp.tanh(c * (y + 0.044715 * y * y * y)))
    elif activation == "tanh":
        y = jnp.tanh(y)
    o_ref[...] = y.astype(o_ref.dtype)


def dense(x, w, b, activation=None, out_dtype=jnp.bfloat16, tm=512, tn=768):
    M, K = x.shape
    _, N = w.shape
    tm, Mp = _choose_rows_tile(M, tm)
    tn = _pick_lane_tile(N, tn)

    x = _pad_rows(x.astype(jnp.bfloat16), Mp)
    w = w.astype(jnp.bfloat16)
    b2 = b.reshape(1, N).astype(jnp.float32)

    cost = pl.CostEstimate(
        flops=2 * Mp * N * K,
        transcendentals=Mp * N if activation in ("gelu", "tanh") else 0,
        bytes_accessed=2 * ((N // tn) * Mp * K + K * N) + 2 * Mp * N)

    out = pl.pallas_call(
        functools.partial(_dense_kernel, activation=activation),
        out_shape=jax.ShapeDtypeStruct((Mp, N), out_dtype),
        # N-tiles outer, M-tiles inner: weight strip (K, tn) has index (0, j)
        # which is constant across the inner loop -> DMA'd once, kept resident.
        grid=(N // tn, Mp // tm),
        in_specs=[
            pl.BlockSpec((tm, K), lambda j, i: (i, 0)),
            pl.BlockSpec((K, tn), lambda j, i: (0, j)),
            pl.BlockSpec((1, tn), lambda j, i: (0, j)),
        ],
        out_specs=pl.BlockSpec((tm, tn), lambda j, i: (i, j)),
        compiler_params=pltpu.CompilerParams(
            dimension_semantics=("parallel", "parallel"),
            vmem_limit_bytes=_VMEM_LIMIT),
        cost_estimate=cost,
    )(x, w, b2)
    return out[:M] if Mp != M else out


# ----------------------------------------------------------------------------
# Dense with fused residual-add + LayerNorm epilogue (weight fully resident):
#   o = LayerNorm(x @ w + b + residual) * gamma + beta
# ----------------------------------------------------------------------------
def _dense_add_ln_kernel(x_ref, w_ref, b_ref, r_ref, g_ref, bt_ref, o_ref, *, eps):
    h = jnp.dot(x_ref[...], w_ref[...], preferred_element_type=jnp.float32)
    h = h + b_ref[...] + r_ref[...].astype(jnp.float32)
    mu = jnp.mean(h, axis=-1, keepdims=True)
    var = jnp.mean((h - mu) * (h - mu), axis=-1, keepdims=True)
    inv = jax.lax.rsqrt(var + eps)
    o_ref[...] = ((h - mu) * inv * g_ref[...] + bt_ref[...]).astype(o_ref.dtype)


def dense_add_layernorm(x, w, b, residual, gamma, beta, eps=1e-12,
                        out_dtype=jnp.bfloat16, tm=512):
    M, K = x.shape
    _, N = w.shape
    tm, Mp = _choose_rows_tile(M, tm)

    x = _pad_rows(x.astype(jnp.bfloat16), Mp)
    residual = _pad_rows(residual.astype(jnp.bfloat16), Mp)
    w = w.astype(jnp.bfloat16)
    b2 = b.reshape(1, N).astype(jnp.float32)
    g2 = gamma.reshape(1, N).astype(jnp.float32)
    bt2 = beta.reshape(1, N).astype(jnp.float32)

    cost = pl.CostEstimate(
        flops=2 * Mp * N * K + 10 * Mp * N,
        transcendentals=0,
        bytes_accessed=2 * (Mp * K + K * N + 2 * Mp * N))

    out = pl.pallas_call(
        functools.partial(_dense_add_ln_kernel, eps=eps),
        out_shape=jax.ShapeDtypeStruct((Mp, N), out_dtype),
        grid=(Mp // tm,),
        in_specs=[
            pl.BlockSpec((tm, K), lambda i: (i, 0)),
            pl.BlockSpec((K, N), lambda i: (0, 0)),   # constant index -> resident
            pl.BlockSpec((1, N), lambda i: (0, 0)),
            pl.BlockSpec((tm, N), lambda i: (i, 0)),
            pl.BlockSpec((1, N), lambda i: (0, 0)),
            pl.BlockSpec((1, N), lambda i: (0, 0)),
        ],
        out_specs=pl.BlockSpec((tm, N), lambda i: (i, 0)),
        compiler_params=pltpu.CompilerParams(
            dimension_semantics=("arbitrary",),
            vmem_limit_bytes=_VMEM_LIMIT),
        cost_estimate=cost,
    )(x, w, b2, residual, g2, bt2)
    return out[:M] if Mp != M else out


# ----------------------------------------------------------------------------
# Row-tiled LayerNorm (embedding LN) — bf16 input, f32 stats
# ----------------------------------------------------------------------------
def _ln_kernel(x_ref, g_ref, b_ref, o_ref, *, eps):
    h = x_ref[...].astype(jnp.float32)
    mu = jnp.mean(h, axis=-1, keepdims=True)
    var = jnp.mean((h - mu) * (h - mu), axis=-1, keepdims=True)
    inv = jax.lax.rsqrt(var + eps)
    o_ref[...] = ((h - mu) * inv * g_ref[...] + b_ref[...]).astype(o_ref.dtype)


def layernorm(x, gamma, beta, eps=1e-12, out_dtype=jnp.bfloat16, tm=512):
    M, H = x.shape
    tm, Mp = _choose_rows_tile(M, tm)
    x = _pad_rows(x.astype(jnp.bfloat16), Mp)
    out = pl.pallas_call(
        functools.partial(_ln_kernel, eps=eps),
        out_shape=jax.ShapeDtypeStruct((Mp, H), out_dtype),
        grid=(Mp // tm,),
        in_specs=[
            pl.BlockSpec((tm, H), lambda i: (i, 0)),
            pl.BlockSpec((1, H), lambda i: (0, 0)),
            pl.BlockSpec((1, H), lambda i: (0, 0)),
        ],
        out_specs=pl.BlockSpec((tm, H), lambda i: (i, 0)),
        compiler_params=pltpu.CompilerParams(
            dimension_semantics=("parallel",),
            vmem_limit_bytes=_VMEM_LIMIT),
    )(x, gamma.reshape(1, H).astype(jnp.float32),
      beta.reshape(1, H).astype(jnp.float32))
    return out[:M] if Mp != M else out


# ----------------------------------------------------------------------------
# Multi-head self-attention, grid = (batch, head_group)
#   q, k, v: [B, S, H]  ->  context [B, S, H]
#   Each grid step processes a lane-aligned group of heads (128 lanes for dh=64).
# ----------------------------------------------------------------------------
def _attn_kernel(q_ref, k_ref, v_ref, o_ref, *, heads_per_block, head_dim, scale):
    q = q_ref[0]                             # [S, W]  (bf16), W = heads_per_block*dh
    k = k_ref[0]
    v = v_ref[0]
    outs = []
    for h in range(heads_per_block):         # static, small (<= 2 for BERT-base)
        lo, hi = h * head_dim, (h + 1) * head_dim
        qs, ks, vs = q[:, lo:hi], k[:, lo:hi], v[:, lo:hi]
        # contract on head_dim (no explicit K transpose)
        s = jax.lax.dot_general(
            qs, ks, dimension_numbers=(((1,), (1,)), ((), ())),
            preferred_element_type=jnp.float32) * scale
        m = jnp.max(s, axis=-1, keepdims=True)
        p = jnp.exp(s - m)
        denom = jnp.sum(p, axis=-1, keepdims=True)
        # TODO(synk): approx reciprocal (EUP) — ~1e-3 rel. error in attention probs.
        p = p * pl.reciprocal(denom, approx=True)
        ctx = jnp.dot(p.astype(vs.dtype), vs, preferred_element_type=jnp.float32)
        outs.append(ctx)
    out = outs[0] if heads_per_block == 1 else jnp.concatenate(outs, axis=-1)
    o_ref[0] = out.astype(o_ref.dtype)       # single lane-dense (W-wide) store


def _heads_per_block(num_heads, head_dim):
    hpb = max(1, 128 // head_dim)
    hpb = min(hpb, num_heads)
    while num_heads % hpb:
        hpb -= 1
    return hpb


def multihead_attention(q, k, v, num_heads, head_dim):
    B, S, H = q.shape
    hpb = _heads_per_block(num_heads, head_dim)
    W = hpb * head_dim
    num_groups = num_heads // hpb
    scale = 1.0 / math.sqrt(head_dim)        # Python float, not a captured tracer

    cost = pl.CostEstimate(
        flops=4 * B * num_heads * S * S * head_dim,
        transcendentals=B * num_heads * S * S,
        bytes_accessed=2 * B * S * 4 * H)

    return pl.pallas_call(
        functools.partial(_attn_kernel, heads_per_block=hpb,
                          head_dim=head_dim, scale=scale),
        out_shape=jax.ShapeDtypeStruct((B, S, H), jnp.bfloat16),
        grid=(B, num_groups),
        in_specs=[
            pl.BlockSpec((1, S, W), lambda b, g: (b, 0, g)),
            pl.BlockSpec((1, S, W), lambda b, g: (b, 0, g)),
            pl.BlockSpec((1, S, W), lambda b, g: (b, 0, g)),
        ],
        out_specs=pl.BlockSpec((1, S, W), lambda b, g: (b, 0, g)),
        compiler_params=pltpu.CompilerParams(
            dimension_semantics=("parallel", "parallel"),
            vmem_limit_bytes=_VMEM_LIMIT),
        cost_estimate=cost,
    )(q.astype(jnp.bfloat16), k.astype(jnp.bfloat16), v.astype(jnp.bfloat16))


# ----------------------------------------------------------------------------
# Fused pooler (CLS tanh projection) + classifier
# ----------------------------------------------------------------------------
def _pooler_cls_kernel(x_ref, wp_ref, bp_ref, wc_ref, bc_ref, o_ref):
    pooled = jnp.tanh(
        jnp.dot(x_ref[...], wp_ref[...], preferred_element_type=jnp.float32)
        + bp_ref[...])
    logits = jnp.dot(pooled.astype(wc_ref.dtype), wc_ref[...],
                     preferred_element_type=jnp.float32) + bc_ref[...]
    o_ref[...] = logits.astype(o_ref.dtype)


def pooler_classifier(cls_tok, wp, bp, wc, bc):
    B, H = cls_tok.shape
    C = wc.shape[1]
    return pl.pallas_call(
        _pooler_cls_kernel,
        out_shape=jax.ShapeDtypeStruct((B, C), jnp.float32),
        grid=(1,),
        in_specs=[
            pl.BlockSpec((B, H), lambda i: (0, 0)),
            pl.BlockSpec((H, H), lambda i: (0, 0)),
            pl.BlockSpec((1, H), lambda i: (0, 0)),
            pl.BlockSpec((H, C), lambda i: (0, 0)),
            pl.BlockSpec((1, C), lambda i: (0, 0)),
        ],
        out_specs=pl.BlockSpec((B, C), lambda i: (0, 0)),
        compiler_params=pltpu.CompilerParams(vmem_limit_bytes=_VMEM_LIMIT),
    )(cls_tok.astype(jnp.bfloat16), wp.astype(jnp.bfloat16),
      bp.reshape(1, H).astype(jnp.float32), wc.astype(jnp.bfloat16),
      bc.reshape(1, C).astype(jnp.float32))


# ----------------------------------------------------------------------------
# Parameter construction (deterministic, synthetic)
# ----------------------------------------------------------------------------
def init_bert_params(key, *, vocab_size, hidden_size, num_layers, num_heads,
                     intermediate_size, max_position_embeddings, type_vocab_size,
                     num_classes):
    H = hidden_size

    def nrm(k, shape, dtype=jnp.float32):
        return (0.02 * jax.random.normal(k, shape, dtype=jnp.float32)).astype(dtype)

    keys = jax.random.split(key, 4 + num_layers)
    p = {}
    p["word_emb"] = nrm(keys[0], (vocab_size, H))
    p["pos_emb"] = nrm(keys[1], (max_position_embeddings, H))
    p["type_emb"] = nrm(keys[2], (type_vocab_size, H))
    p["emb_ln_g"] = jnp.ones((H,), jnp.float32)
    p["emb_ln_b"] = jnp.zeros((H,), jnp.float32)

    layers = []
    for li in range(num_layers):
        lk = jax.random.split(keys[4 + li], 6)
        wq = nrm(lk[0], (H, H))
        wk = nrm(lk[1], (H, H))
        wv = nrm(lk[2], (H, H))
        layers.append({
            # fused QKV projection weight (bf16 MXU inputs)
            "w_qkv": jnp.concatenate([wq, wk, wv], axis=1).astype(jnp.bfloat16),
            "b_qkv": jnp.zeros((3 * H,), jnp.float32),
            "wo": nrm(lk[3], (H, H), jnp.bfloat16),
            "bo": jnp.zeros((H,), jnp.float32),
            "ln1_g": jnp.ones((H,), jnp.float32),
            "ln1_b": jnp.zeros((H,), jnp.float32),
            "wi": nrm(lk[4], (H, intermediate_size), jnp.bfloat16),
            "bi": jnp.zeros((intermediate_size,), jnp.float32),
            "wf": nrm(lk[5], (intermediate_size, H), jnp.bfloat16),
            "bf": jnp.zeros((H,), jnp.float32),
            "ln2_g": jnp.ones((H,), jnp.float32),
            "ln2_b": jnp.zeros((H,), jnp.float32),
        })
    p["layers"] = layers

    pk = jax.random.split(keys[3], 2)
    p["pooler_w"] = nrm(pk[0], (H, H), jnp.bfloat16)
    p["pooler_b"] = jnp.zeros((H,), jnp.float32)
    p["cls_w"] = nrm(pk[1], (H, num_classes), jnp.bfloat16)
    p["cls_b"] = jnp.zeros((num_classes,), jnp.float32)
    return p


# ----------------------------------------------------------------------------
# Forward pass (glue in plain JAX, hot paths in Pallas kernels)
# ----------------------------------------------------------------------------
def bert_for_text_classification(params, input_ids, *, num_heads):
    B, S = input_ids.shape
    H = params["word_emb"].shape[1]
    dh = H // num_heads

    # --- embeddings (lookup is glue; LN is a kernel, bf16-cast before LN) ---
    word = params["word_emb"][input_ids]                 # [B, S, H]
    pos = params["pos_emb"][:S][None, :, :]              # [1, S, H]
    typ = params["type_emb"][0][None, None, :]           # [1, 1, H]
    emb = (word + pos + typ).reshape(B * S, H).astype(jnp.bfloat16)
    hidden = layernorm(emb, params["emb_ln_g"], params["emb_ln_b"])   # bf16 [B*S, H]

    # --- transformer encoder layers ---
    for lp in params["layers"]:
        # fused Q/K/V projection in one matmul
        qkv = dense(hidden, lp["w_qkv"], lp["b_qkv"],
                    out_dtype=jnp.bfloat16)              # [B*S, 3H]
        q = qkv[:, 0 * H:1 * H].reshape(B, S, H)
        k = qkv[:, 1 * H:2 * H].reshape(B, S, H)
        v = qkv[:, 2 * H:3 * H].reshape(B, S, H)

        ctx = multihead_attention(q, k, v, num_heads, dh)  # [B, S, H] bf16
        ctx = ctx.reshape(B * S, H)

        # output projection with fused residual-add + LayerNorm epilogue
        hidden = dense_add_layernorm(ctx, lp["wo"], lp["bo"], hidden,
                                     lp["ln1_g"], lp["ln1_b"])

        # feed-forward
        inter = dense(hidden, lp["wi"], lp["bi"], activation="gelu",
                      out_dtype=jnp.bfloat16)            # [B*S, 4H]
        hidden = dense_add_layernorm(inter, lp["wf"], lp["bf"], hidden,
                                     lp["ln2_g"], lp["ln2_b"])

    # --- pooler (CLS token) + classifier, fused ---
    cls_tok = hidden.reshape(B, S, H)[:, 0, :]           # [B, H]
    logits = pooler_classifier(cls_tok, params["pooler_w"], params["pooler_b"],
                               params["cls_w"], params["cls_b"])
    return logits


# ----------------------------------------------------------------------------
if __name__ == "__main__":
    # Small, forward-consistent shapes.
    batch = 2
    seq = 8
    vocab_size = 100
    hidden_size = 32
    num_layers = 2
    num_heads = 4
    intermediate_size = 64
    max_position_embeddings = 512
    type_vocab_size = 2
    num_classes = 3

    key = jax.random.PRNGKey(0)
    pkey, ikey = jax.random.split(key)

    params = init_bert_params(
        pkey,
        vocab_size=vocab_size,
        hidden_size=hidden_size,
        num_layers=num_layers,
        num_heads=num_heads,
        intermediate_size=intermediate_size,
        max_position_embeddings=max_position_embeddings,
        type_vocab_size=type_vocab_size,
        num_classes=num_classes,
    )

    input_ids = jax.random.randint(ikey, (batch, seq), 0, vocab_size,
                                   dtype=jnp.int32)

    logits = bert_for_text_classification(params, input_ids,
                                          num_heads=num_heads)
    logits = jax.block_until_ready(logits)
    assert logits.shape == (batch, num_classes)
    print("KERNEL_OK")
</pallas_src>

<mosaic_0001>
module attributes {stable_mosaic.version = 11 : i64} {
  func.func @_ln_kernel(%arg0: i32, %arg1: memref<16x32xbf16, #tpu.memory_space<vmem>>, %arg2: memref<1x32xf32, #tpu.memory_space<vmem>>, %arg3: memref<1x32xf32, #tpu.memory_space<vmem>>, %arg4: memref<16x32xbf16, #tpu.memory_space<vmem>>) attributes {dimension_semantics = [#tpu.dimension_semantics<parallel>], iteration_bounds = array<i64: 1>, scalar_prefetch = 0 : i64, scratch_operands = 0 : i64, tpu.core_type = #tpu.core_type<tc>, window_params = [{transform_indices = @transform_0, window_bounds = array<i64: 16, 32>}, {pipeline_mode = #tpu.pipeline_mode<synchronous>, transform_indices = @transform_1, window_bounds = array<i64: 1, 32>}, {pipeline_mode = #tpu.pipeline_mode<synchronous>, transform_indices = @transform_2, window_bounds = array<i64: 1, 32>}, {transform_indices = @transform_3, window_bounds = array<i64: 16, 32>}]} {
    %c0 = arith.constant 0 : index
    %c0_0 = arith.constant 0 : index
    %0 = vector.load %arg1[%c0, %c0_0] : memref<16x32xbf16, #tpu.memory_space<vmem>>, vector<16x32xbf16>
    %1 = arith.extf %0 : vector<16x32xbf16> to vector<16x32xf32>
    %cst = arith.constant dense<0.000000e+00> : vector<16xf32>
    %2 = vector.multi_reduction <add>, %1, %cst [1] : vector<16x32xf32> to vector<16xf32>
    %3 = vector.shape_cast %2 : vector<16xf32> to vector<16x1xf32>
    %cst_1 = arith.constant 3.200000e+01 : f32
    %4 = vector.broadcast %cst_1 : f32 to vector<16x1xf32>
    %5 = arith.divf %3, %4 : vector<16x1xf32>
    %6 = vector.broadcast %5 : vector<16x1xf32> to vector<16x32xf32>
    %7 = arith.subf %1, %6 : vector<16x32xf32>
    %8 = vector.broadcast %5 : vector<16x1xf32> to vector<16x32xf32>
    %9 = arith.subf %1, %8 : vector<16x32xf32>
    %10 = arith.mulf %7, %9 : vector<16x32xf32>
    %cst_2 = arith.constant dense<0.000000e+00> : vector<16xf32>
    %11 = vector.multi_reduction <add>, %10, %cst_2 [1] : vector<16x32xf32> to vector<16xf32>
    %12 = vector.shape_cast %11 : vector<16xf32> to vector<16x1xf32>
    %cst_3 = arith.constant 3.200000e+01 : f32
    %13 = vector.broadcast %cst_3 : f32 to vector<16x1xf32>
    %14 = arith.divf %12, %13 : vector<16x1xf32>
    %cst_4 = arith.constant 9.99999996E-13 : f32
    %15 = vector.broadcast %cst_4 : f32 to vector<16x1xf32>
    %16 = arith.addf %14, %15 : vector<16x1xf32>
    %17 = math.rsqrt %16 : vector<16x1xf32>
    %18 = vector.broadcast %5 : vector<16x1xf32> to vector<16x32xf32>
    %19 = arith.subf %1, %18 : vector<16x32xf32>
    %20 = vector.broadcast %17 : vector<16x1xf32> to vector<16x32xf32>
    %21 = arith.mulf %19, %20 : vector<16x32xf32>
    %c0_5 = arith.constant 0 : index
    %c0_6 = arith.constant 0 : index
    %22 = vector.load %arg2[%c0_5, %c0_6] : memref<1x32xf32, #tpu.memory_space<vmem>>, vector<1x32xf32>
    %23 = vector.broadcast %22 : vector<1x32xf32> to vector<16x32xf32>
    %24 = arith.mulf %21, %23 : vector<16x32xf32>
    %c0_7 = arith.constant 0 : index
    %c0_8 = arith.constant 0 : index
    %25 = vector.load %arg3[%c0_7, %c0_8] : memref<1x32xf32, #tpu.memory_space<vmem>>, vector<1x32xf32>
    %26 = vector.broadcast %25 : vector<1x32xf32> to vector<16x32xf32>
    %27 = arith.addf %24, %26 : vector<16x32xf32>
    %28 = arith.truncf %27 : vector<16x32xf32> to vector<16x32xbf16>
    %c0_9 = arith.constant 0 : index
    %c0_10 = arith.constant 0 : index
    %29 = vector.load %arg4[%c0_9, %c0_10] : memref<16x32xbf16, #tpu.memory_space<vmem>>, vector<16x32xbf16>
    tpu.vector_store %arg4[%c0_9, %c0_10], %28 {strides = array<i32>} : memref<16x32xbf16, #tpu.memory_space<vmem>>, vector<16x32xbf16>,
    return
  }
  func.func @transform_0(%arg0: i32) -> (i32, i32) {
    %c0_i32 = arith.constant 0 : i32
    %c0_i32_0 = arith.constant 0 : i32
    return %arg0, %c0_i32 : i32, i32
  }
  func.func @transform_1(%arg0: i32) -> (i32, i32) {
    %c0_i32 = arith.constant 0 : i32
    %c0_i32_0 = arith.constant 0 : i32
    %c0_i32_1 = arith.constant 0 : i32
    return %c0_i32, %c0_i32_0 : i32, i32
  }
  func.func @transform_2(%arg0: i32) -> (i32, i32) {
    %c0_i32 = arith.constant 0 : i32
    %c0_i32_0 = arith.constant 0 : i32
    %c0_i32_1 = arith.constant 0 : i32
    return %c0_i32, %c0_i32_0 : i32, i32
  }
  func.func @transform_3(%arg0: i32) -> (i32, i32) {
    %c0_i32 = arith.constant 0 : i32
    %c0_i32_0 = arith.constant 0 : i32
    return %arg0, %c0_i32 : i32, i32
  }
}

</mosaic_0001>

<llo_original>
// kernel: tpu_custom_call.1
$region0: #{tpu_custom_call.1}
  #allocation0 [shape = 'u32[]', space=smem, size = 0x4, offset = 0x4, fixed_abs, tag = 'smem constant byte address 0x4 - core index']
  #allocation1 [shape = 'u32[144,128]{1,0:T(1,128)}', space=vmem, size = 0x12000, scoped, tag = 'internal scratch']
  %s0 = inlined_call_operand.hbm [shape: bf16[16,32], index: 0, kind: input, shape index: {}]
  %s1 = inlined_call_operand.hbm [shape: f32[1,32], index: 1, kind: input, shape index: {}]
  %s2 = inlined_call_operand.hbm [shape: f32[1,32], index: 2, kind: input, shape index: {}]
  %s3 = inlined_call_operand.hbm [shape: bf16[16,32], index: 3, kind: output, shape index: {}]
  %s4 = sld [smem:[#allocation0]]
  $region34: #{tpu_custom_call.1} parent=0
    _
  %s6 = ssub.s32 1, %s4
  %s7 = scalar_select 0, %s6, %s4
  $region1: #{tpu_custom_call.1} parent=0
    #allocation2 [shape = 'u8[4096]{0}', space=vmem, size = 0x1000, scoped, tag = 'input window, operand 0, single buffered']
    #allocation3 [shape = 's32[1]{0}', space=sflag, size = 0x4, scoped, tag = 'scoped memory for tpu_custom_call.1']
    #allocation4 [shape = 's32[1]{0}', space=sflag, size = 0x4, scoped, tag = 'scoped memory for tpu_custom_call.1']
    #allocation5 [shape = 'u8[512]{0}', space=vmem, size = 0x400, scoped, tag = 'input window, operand 1, single buffered']
    #allocation6 [shape = 's32[1]{0}', space=sflag, size = 0x4, scoped, tag = 'scoped memory for tpu_custom_call.1']
    #allocation7 [shape = 'u8[512]{0}', space=vmem, size = 0x400, scoped, tag = 'input window, operand 2, single buffered']
    #allocation8 [shape = 'u8[4096]{0}', space=vmem, size = 0x1000, scoped, tag = 'output window, operand 0, single buffered']
    %8 = vsyncpa [#allocation3], 0
    %9 = vsyncpa [#allocation6], 0
    %10 = vsyncpa [#allocation4], 0
    // Predicated region
    $region2: #{tpu_custom_call.1} parent=1 // pred_check
      _
    $region3: #{tpu_custom_call.1} parent=1 // pred_check_branch
      %12 = sbr.rel (0) target = $region5
    $region4: #{tpu_custom_call.1} parent=1 // pred_region
      %s14 = ssub.s32 128, 128
      %15 = vsyncadd [#allocation3], %s14
      %s16 = sshll.u32 [#allocation2], 4
      %s17 = int_to_ptr.vmem [resolvable:$true] %s16
      %22 = dma.hbm_to_vmem [thread:$0]  %s0, 128, %s17, [#allocation3], 64, 64, 4
    $region5: #{tpu_custom_call.1} parent=1 // pred_fallthru
      _
    // Predicated region
    $region6: #{tpu_custom_call.1} parent=1 // pred_check
      _
    $region7: #{tpu_custom_call.1} parent=1 // pred_check_branch
      %24 = sbr.rel (0) target = $region9
    $region8: #{tpu_custom_call.1} parent=1 // pred_region
      %s26 = ssub.s32 16, 16
      %27 = vsyncadd [#allocation6], %s26
      %s29 = sshll.u32 [#allocation5], 4
      %s30 = int_to_ptr.vmem [resolvable:$true] %s29
      %32 = dma.hbm_to_vmem [thread:$0]  %s1, 16, %s30, [#allocation6]
    $region9: #{tpu_custom_call.1} parent=1 // pred_fallthru
      _
    // Predicated region
    $region10: #{tpu_custom_call.1} parent=1 // pred_check
      _
    $region11: #{tpu_custom_call.1} parent=1 // pred_check_branch
      %34 = sbr.rel (0) target = $region13
    $region12: #{tpu_custom_call.1} parent=1 // pred_region
      %s36 = ssub.s32 16, 16
      %37 = vsyncadd [#allocation6], %s36
      %s39 = sshll.u32 [#allocation7], 4
      %s40 = int_to_ptr.vmem [resolvable:$true] %s39
      %42 = dma.hbm_to_vmem [thread:$0]  %s2, 16, %s40, [#allocation6]
    $region13: #{tpu_custom_call.1} parent=1 // pred_fallthru
      _
    // Predicated region
    $region14: #{tpu_custom_call.1} parent=1 // pred_check
      _
    $region15: #{tpu_custom_call.1} parent=1 // pred_check_branch
      %44 = sbr.rel (0) target = $region17
    $region16: #{tpu_custom_call.1} parent=1 // pred_region
      %45 = dma.done [#allocation3], 128
    $region17: #{tpu_custom_call.1} parent=1 // pred_fallthru
      _
    // Predicated region
    $region18: #{tpu_custom_call.1} parent=1 // pred_check
      _
    $region19: #{tpu_custom_call.1} parent=1 // pred_check_branch
      %47 = sbr.rel (0) target = $region21
    $region20: #{tpu_custom_call.1} parent=1 // pred_region
      %48 = dma.done [#allocation6], 16
    $region21: #{tpu_custom_call.1} parent=1 // pred_fallthru
      _
    // Predicated region
    $region22: #{tpu_custom_call.1} parent=1 // pred_check
      _
    $region23: #{tpu_custom_call.1} parent=1 // pred_check_branch
      %50 = sbr.rel (0) target = $region25
    $region24: #{tpu_custom_call.1} parent=1 // pred_region
      %51 = dma.done [#allocation6], 16
    $region25: #{tpu_custom_call.1} parent=1 // pred_fallthru
      _
    %v52 = vld [vmem:[#allocation2] sm:$0xf]
    %v53 = vld [vmem:[#allocation2 + $0x4] sm:$0xf]
    %v54 = vunpack.c.l.bf16 %v52
    %v55 = vunpack.c.l.bf16 %v53
    %vm56 = vcmask 261120
    %v57 = vsel %vm56, %v54, 0.0
    %58 = vadd.xlane.f32.xlu0 %v57
    %v59 = vpop.xlane.xlu0 %58
    %v60 = vsel %vm56, %v55, 0.0
    %61 = vadd.xlane.f32.xlu0 %v60
    %v62 = vpop.xlane.xlu0 %61
    %v63 = vrcp.pop 32.0
    %v64 = vmul.f32 %v59, %v63
    %v65 = vmul.f32 %v62, %v63
    %v66 = vsub.f32 %v54, %v64
    %v67 = vsub.f32 %v55, %v65
    %v68 = vmul.f32 %v66, %v66
    %v69 = vmul.f32 %v67, %v67
    %v70 = vsel %vm56, %v68, 0.0
    %71 = vadd.xlane.f32.xlu0 %v70
    %v72 = vpop.xlane.xlu0 %71
    %v73 = vsel %vm56, %v69, 0.0
    %74 = vadd.xlane.f32.xlu0 %v73
    %v75 = vpop.xlane.xlu0 %74
    %v76 = vmul.f32 %v72, %v63
    %v77 = vmul.f32 %v75, %v63
    %v78 = vadd.f32 %v76, 1e-12
    %v79 = vadd.f32 %v77, 1e-12
    %v80 = vrsqrt.pop %v78
    %v81 = vrsqrt.pop %v79
    %v82 = vmul.f32 %v66, %v80
    %v83 = vmul.f32 %v67, %v81
    %v84 = vld [vmem:[#allocation5] sm:$0x1]
    %v86 = vlaneseq
    %v87 = vshrl.u32 %v86, 7
    %v88 = vsub.s32 0, %v87
    %v89 = vrot.slane %v84, %v88
    %v91 = vmul.f32 %v82, %v89
    %v92 = vmul.f32 %v83, %v89
    %v93 = vld [vmem:[#allocation7] sm:$0x1]
    %v95 = vlaneseq
    %v96 = vshrl.u32 %v95, 7
    %v97 = vsub.s32 0, %v96
    %v98 = vrot.slane %v93, %v97
    %v100 = vadd.f32 %v91, %v98
    %v101 = vadd.f32 %v92, %v98
    %v102 = vpack.c.bf16 %v101, %v100
    %v104 = vunpack.c.l.b16 %v102
    %v105 = vunpack.c.h.b16 %v102
    %v106 = vpack.c.b16 %v104, %v104
    %v107 = vpack.c.b16 %v105, %v105
    %vm110 = vcmask 257024
    %111 = vst.msk [vmem:[#allocation8] sm:$0xf] %vm110, %v106
    %112 = vst.msk [vmem:[#allocation8 + $0x4] sm:$0xf] %vm110, %v107
    // Predicated region
    $region26: #{tpu_custom_call.1} parent=1 // pred_check
      _
    $region27: #{tpu_custom_call.1} parent=1 // pred_check_branch
      %114 = sbr.rel (0) target = $region29
    $region28: #{tpu_custom_call.1} parent=1 // pred_region
      %s116 = ssub.s32 128, 128
      %117 = vsyncadd [#allocation4], %s116
      %s118 = sshll.u32 [#allocation8], 4
      %s119 = int_to_ptr.vmem [resolvable:$true] %s118
      %124 = dma.vmem_to_hbm [thread:$0]  %s119, 128, %s3, [#allocation4], 64, 64, 4
    $region29: #{tpu_custom_call.1} parent=1 // pred_fallthru
      _
    // Predicated region
    $region30: #{tpu_custom_call.1} parent=1 // pred_check
      _
    $region31: #{tpu_custom_call.1} parent=1 // pred_check_branch
      %126 = sbr.rel (0) target = $region33
    $region32: #{tpu_custom_call.1} parent=1 // pred_region
      %127 = dma.done [#allocation4], 128
    $region33: #{tpu_custom_call.1} parent=1 // pred_fallthru
      _
    %128 = vsyncpa [#allocation3], 1
    %129 = vsyncpa [#allocation6], 1
    %130 = vsyncpa [#allocation4], 1

</llo_original>
